<compile_context>
chip_gen: v6e
topology: v6e:2x2x1
jax: 0.10.0
libtpu: 0.0.40
codegen_flags: <defaults>
</compile_context>

<pallas_src>
import math

import jax
import jax.numpy as jnp
from jax.experimental import pallas as pl
from jax.experimental.pallas import tpu as pltpu


IN_F = 5              # fc1 input features
IN_PAD = 8            # padded x width (col 5 = 1.0 folds b1, cols 6,7 = 0)
HID = 128             # fc1 / fc2 hidden width
N_ACT = 4             # number of Q-values


def dqn_kernel(x_ref, w1_ref, w2_ref, wq_ref, b_ref, q_ref):
    """One batch tile of the dueling-DQN forward pass.

    x_ref : (TILE_B, 8)    input tile, col 5 == 1.0 (folds b1), cols 6,7 == 0
    w1_ref: (8, 128)       fc1 weight with b1 folded into row 5
    w2_ref: (128, 128)     fc2 weight
    wq_ref: (128, 128)     folded dueling head weight (cols 0:4 real, rest 0)
    b_ref : (2, 128)       row 0 = b2, row 1 = folded head bias (padded)
    q_ref : (TILE_B, 128)  lane-dense output slab (cols 0:4 are the Q-values)
    """
    x = x_ref[...]
    b = b_ref[...]
    b2 = b[0:1, :]                      # (1, 128)
    bq = b[1:2, :]                      # (1, 128)

    # fc1 + relu (bias folded into w1 via the ones column of x)
    h1 = jnp.maximum(
        jnp.dot(x, w1_ref[...], preferred_element_type=jnp.float32), 0.0)

    # fc2 + relu
    h2 = jnp.maximum(
        jnp.dot(h1, w2_ref[...], preferred_element_type=jnp.float32) + b2, 0.0)

    # folded dueling head: single matmul + bias, lane-dense store
    q_ref[...] = jnp.dot(h2, wq_ref[...],
                         preferred_element_type=jnp.float32) + bq


def _round_up(n, m):
    return ((n + m - 1) // m) * m


def _cores_per_chip():
    """Best-effort TensorCore-per-chip count (2 on v7x, 1 on v5e/v6e)."""
    try:
        d = jax.devices()[0]
        for attr in ("num_cores", "core_count", "num_cores_per_chip"):
            v = getattr(d, attr, None)
            if isinstance(v, int) and v > 0:
                return v
    except Exception:
        pass
    return 1


def dqn_forward(x, params, *, max_tile_b=1024):
    """x: (B, 5) float32. params: dict of weights/biases (see init_params)."""
    B = x.shape[0]

    # One grid step per TensorCore when possible (so v7x uses both cores),
    # otherwise minimal step count; tiles capped at 1024 rows (~3 MiB
    # working set, well under VMEM on all generations).
    cores = max(1, _cores_per_chip())
    tile_b = max(8, min(max_tile_b, _round_up(pl.cdiv(B, cores), 8)))
    grid = (pl.cdiv(B, tile_b),)

    w1, b1 = params["w1"], params["b1"]
    w2, b2 = params["w2"], params["b2"]
    wv, bv = params["wv"], params["bv"]
    wa, ba = params["wa"], params["ba"]

    # --- wrapper-side weight folding (pure layout / algebra, no per-step cost)
    # Pad x to 8 columns: col 5 = 1.0 folds b1 into w1, cols 6,7 = 0.
    ones = jnp.ones((B, 1), jnp.float32)
    zeros = jnp.zeros((B, IN_PAD - IN_F - 1), jnp.float32)
    x_pad = jnp.concatenate([x.astype(jnp.float32), ones, zeros], axis=1)

    w1_pad = jnp.concatenate(
        [w1, b1[None, :], jnp.zeros((IN_PAD - IN_F - 1, HID), jnp.float32)],
        axis=0)                                                   # (8, 128)

    # Fold the dueling combine into the head: q = val*1 + adv @ (I - 1/4 11^T)
    M = jnp.eye(N_ACT, dtype=jnp.float32) - 1.0 / N_ACT          # (4, 4)
    wq = wv @ jnp.ones((1, N_ACT), jnp.float32) + wa @ M          # (128, 4)
    bq = bv * jnp.ones((N_ACT,), jnp.float32) + ba @ M            # (4,)

    # Lane-dense head: pad to 128 output columns (zeros beyond col 3).
    wq_pad = jnp.pad(wq, ((0, 0), (0, HID - N_ACT)))              # (128, 128)
    bq_pad = jnp.pad(bq, (0, HID - N_ACT))                        # (128,)

    biases = jnp.stack([b2, bq_pad])                              # (2, 128)

    pinned = lambda shape: pl.BlockSpec(shape, lambda i: (0, 0))

    q_full = pl.pallas_call(
        dqn_kernel,
        out_shape=jax.ShapeDtypeStruct((B, HID), jnp.float32),
        grid=grid,
        in_specs=[
            pl.BlockSpec((tile_b, IN_PAD), lambda i: (i, 0)),     # x: tiled on B
            pinned(w1_pad.shape),                                 # (8, 128)
            pinned(w2.shape),                                     # (128, 128)
            pinned(wq_pad.shape),                                 # (128, 128)
            pinned(biases.shape),                                 # (2, 128)
        ],
        out_specs=pl.BlockSpec((tile_b, HID), lambda i: (i, 0)),  # lane-dense
        compiler_params=pltpu.CompilerParams(
            dimension_semantics=("parallel",)),
    )(x_pad, w1_pad, w2, wq_pad, biases)

    return q_full[:, :N_ACT]


def init_params(key):
    """Deterministic init mimicking PyTorch nn.Linear default
    (uniform in +/-1/sqrt(fan_in)). Weights stored as (in, out)."""
    def linear(key, fan_in, fan_out):
        kw, kb = jax.random.split(key)
        bound = 1.0 / math.sqrt(fan_in)
        w = jax.random.uniform(kw, (fan_in, fan_out), jnp.float32, -bound, bound)
        b = jax.random.uniform(kb, (fan_out,), jnp.float32, -bound, bound)
        return w, b

    k1, k2, k3, k4 = jax.random.split(key, 4)
    w1, b1 = linear(k1, IN_F, HID)
    w2, b2 = linear(k2, HID, HID)
    wv, bv = linear(k3, HID, 1)
    wa, ba = linear(k4, HID, N_ACT)
    return {"w1": w1, "b1": b1, "w2": w2, "b2": b2,
            "wv": wv, "bv": bv, "wa": wa, "ba": ba}


if __name__ == "__main__":
    key = jax.random.PRNGKey(0)
    kx, kp = jax.random.split(key)

    B = 64  # small batch consistent with the (B, 5) module input
    x = jax.random.normal(kx, (B, IN_F), dtype=jnp.float32)
    params = init_params(kp)

    q = jax.block_until_ready(dqn_forward(x, params))

    # Reference check in plain JAX (same math as the PyTorch forward).
    h1 = jnp.maximum(x @ params["w1"] + params["b1"], 0.0)
    h2 = jnp.maximum(h1 @ params["w2"] + params["b2"], 0.0)
    val = h2 @ params["wv"] + params["bv"]
    adv = h2 @ params["wa"] + params["ba"]
    q_ref = val + adv - adv.mean(axis=1, keepdims=True)

    assert q.shape == (B, N_ACT)
    assert jnp.allclose(q, q_ref, atol=1e-4, rtol=1e-4), "mismatch vs reference"

    print("KERNEL_OK")
</pallas_src>

<mosaic_0001>
module attributes {stable_mosaic.version = 11 : i64} {
  func.func @dqn_kernel(%arg0: i32, %arg1: memref<64x8xf32, #tpu.memory_space<vmem>>, %arg2: memref<8x128xf32, #tpu.memory_space<vmem>>, %arg3: memref<128x128xf32, #tpu.memory_space<vmem>>, %arg4: memref<128x128xf32, #tpu.memory_space<vmem>>, %arg5: memref<2x128xf32, #tpu.memory_space<vmem>>, %arg6: memref<64x128xf32, #tpu.memory_space<vmem>>) attributes {dimension_semantics = [#tpu.dimension_semantics<parallel>], iteration_bounds = array<i64: 1>, scalar_prefetch = 0 : i64, scratch_operands = 0 : i64, tpu.core_type = #tpu.core_type<tc>, window_params = [{transform_indices = @transform_0, window_bounds = array<i64: 64, 8>}, {pipeline_mode = #tpu.pipeline_mode<synchronous>, transform_indices = @transform_1, window_bounds = array<i64: 8, 128>}, {pipeline_mode = #tpu.pipeline_mode<synchronous>, transform_indices = @transform_2, window_bounds = array<i64: 128, 128>}, {pipeline_mode = #tpu.pipeline_mode<synchronous>, transform_indices = @transform_3, window_bounds = array<i64: 128, 128>}, {pipeline_mode = #tpu.pipeline_mode<synchronous>, transform_indices = @transform_4, window_bounds = array<i64: 2, 128>}, {transform_indices = @transform_5, window_bounds = array<i64: 64, 128>}]} {
    %c0 = arith.constant 0 : index
    %c0_0 = arith.constant 0 : index
    %0 = vector.load %arg1[%c0, %c0_0] : memref<64x8xf32, #tpu.memory_space<vmem>>, vector<64x8xf32>
    %c0_1 = arith.constant 0 : index
    %c0_2 = arith.constant 0 : index
    %1 = vector.load %arg5[%c0_1, %c0_2] : memref<2x128xf32, #tpu.memory_space<vmem>>, vector<2x128xf32>
    %2 = vector.extract_strided_slice %1 {offsets = [0, 0], sizes = [1, 128], strides = [1, 1]} : vector<2x128xf32> to vector<1x128xf32>
    %3 = vector.extract_strided_slice %1 {offsets = [1, 0], sizes = [1, 128], strides = [1, 1]} : vector<2x128xf32> to vector<1x128xf32>
    %c0_3 = arith.constant 0 : index
    %c0_4 = arith.constant 0 : index
    %4 = vector.load %arg2[%c0_3, %c0_4] : memref<8x128xf32, #tpu.memory_space<vmem>>, vector<8x128xf32>
    %cst = arith.constant dense<0.000000e+00> : vector<64x128xf32>
    %5 = tpu.matmul %0, %4, %cst {dimension_numbers = #tpu.dot_dimension_numbers<[1], [0], [0], [1], [0, 0, 1, 1], [], []>} : vector<64x8xf32>, vector<8x128xf32>, vector<64x128xf32> -> vector<64x128xf32>
    %cst_5 = arith.constant 0.000000e+00 : f32
    %6 = vector.broadcast %cst_5 : f32 to vector<64x128xf32>
    %7 = arith.maximumf %5, %6 : vector<64x128xf32>
    %c0_6 = arith.constant 0 : index
    %c0_7 = arith.constant 0 : index
    %8 = vector.load %arg3[%c0_6, %c0_7] : memref<128x128xf32, #tpu.memory_space<vmem>>, vector<128x128xf32>
    %cst_8 = arith.constant dense<0.000000e+00> : vector<64x128xf32>
    %9 = tpu.matmul %7, %8, %cst_8 {dimension_numbers = #tpu.dot_dimension_numbers<[1], [0], [0], [1], [0, 0, 1, 1], [], []>} : vector<64x128xf32>, vector<128x128xf32>, vector<64x128xf32> -> vector<64x128xf32>
    %10 = vector.broadcast %2 : vector<1x128xf32> to vector<64x128xf32>
    %11 = arith.addf %9, %10 : vector<64x128xf32>
    %cst_9 = arith.constant 0.000000e+00 : f32
    %12 = vector.broadcast %cst_9 : f32 to vector<64x128xf32>
    %13 = arith.maximumf %11, %12 : vector<64x128xf32>
    %c0_10 = arith.constant 0 : index
    %c0_11 = arith.constant 0 : index
    %14 = vector.load %arg4[%c0_10, %c0_11] : memref<128x128xf32, #tpu.memory_space<vmem>>, vector<128x128xf32>
    %cst_12 = arith.constant dense<0.000000e+00> : vector<64x128xf32>
    %15 = tpu.matmul %13, %14, %cst_12 {dimension_numbers = #tpu.dot_dimension_numbers<[1], [0], [0], [1], [0, 0, 1, 1], [], []>} : vector<64x128xf32>, vector<128x128xf32>, vector<64x128xf32> -> vector<64x128xf32>
    %16 = vector.broadcast %3 : vector<1x128xf32> to vector<64x128xf32>
    %17 = arith.addf %15, %16 : vector<64x128xf32>
    %c0_13 = arith.constant 0 : index
    %c0_14 = arith.constant 0 : index
    %18 = vector.load %arg6[%c0_13, %c0_14] : memref<64x128xf32, #tpu.memory_space<vmem>>, vector<64x128xf32>
    tpu.vector_store %arg6[%c0_13, %c0_14], %17 {strides = array<i32>} : memref<64x128xf32, #tpu.memory_space<vmem>>, vector<64x128xf32>,
    return
  }
  func.func @transform_0(%arg0: i32) -> (i32, i32) {
    %c0_i32 = arith.constant 0 : i32
    %c0_i32_0 = arith.constant 0 : i32
    return %arg0, %c0_i32 : i32, i32
  }
  func.func @transform_1(%arg0: i32) -> (i32, i32) {
    %c0_i32 = arith.constant 0 : i32
    %c0_i32_0 = arith.constant 0 : i32
    %c0_i32_1 = arith.constant 0 : i32
    return %c0_i32, %c0_i32_0 : i32, i32
  }
  func.func @transform_2(%arg0: i32) -> (i32, i32) {
    %c0_i32 = arith.constant 0 : i32
    %c0_i32_0 = arith.constant 0 : i32
    %c0_i32_1 = arith.constant 0 : i32
    return %c0_i32, %c0_i32_0 : i32, i32
  }
  func.func @transform_3(%arg0: i32) -> (i32, i32) {
    %c0_i32 = arith.constant 0 : i32
    %c0_i32_0 = arith.constant 0 : i32
    %c0_i32_1 = arith.constant 0 : i32
    return %c0_i32, %c0_i32_0 : i32, i32
  }
  func.func @transform_4(%arg0: i32) -> (i32, i32) {
    %c0_i32 = arith.constant 0 : i32
    %c0_i32_0 = arith.constant 0 : i32
    %c0_i32_1 = arith.constant 0 : i32
    return %c0_i32, %c0_i32_0 : i32, i32
  }
  func.func @transform_5(%arg0: i32) -> (i32, i32) {
    %c0_i32 = arith.constant 0 : i32
    %c0_i32_0 = arith.constant 0 : i32
    return %arg0, %c0_i32 : i32, i32
  }
}

</mosaic_0001>

<llo_original>
// kernel: tpu_custom_call.1
$region0: #{tpu_custom_call.1}
  #allocation0 [shape = 'u32[]', space=smem, size = 0x4, offset = 0x4, fixed_abs, tag = 'smem constant byte address 0x4 - core index']
  #allocation1 [shape = 'u32[144,128]{1,0:T(1,128)}', space=vmem, size = 0x12000, scoped, tag = 'internal scratch']
  %s0 = inlined_call_operand.vmem [shape: f32[64,8], index: 0, kind: input, shape index: {}]
  %s1 = inlined_call_operand.vmem [shape: f32[8,128], index: 1, kind: input, shape index: {}]
  %s2 = inlined_call_operand.hbm [shape: f32[128,128], index: 2, kind: input, shape index: {}]
  %s3 = inlined_call_operand.hbm [shape: f32[128,128], index: 3, kind: input, shape index: {}]
  %s4 = inlined_call_operand.vmem [shape: f32[2,128], index: 4, kind: input, shape index: {}]
  %s5 = inlined_call_operand.hbm [shape: f32[64,128], index: 5, kind: output, shape index: {}]
  %s6 = sld [smem:[#allocation0]]
  $region38: #{tpu_custom_call.1} parent=0
    _
  %s8 = ssub.s32 1, %s6
  %s9 = scalar_select 0, %s8, %s6
  $region1: #{tpu_custom_call.1} parent=0
    #allocation2 [shape = 'u8[65536]{0}', space=vmem, size = 0x10000, scoped, tag = 'input window, operand 2, single buffered']
    #allocation3 [shape = 's32[1]{0}', space=sflag, size = 0x4, scoped, tag = 'scoped memory for tpu_custom_call.1']
    #allocation4 [shape = 's32[1]{0}', space=sflag, size = 0x4, scoped, tag = 'scoped memory for tpu_custom_call.1']
    #allocation5 [shape = 'u8[65536]{0}', space=vmem, size = 0x10000, scoped, tag = 'input window, operand 3, single buffered']
    #allocation6 [shape = 's32[1]{0}', space=sflag, size = 0x4, scoped, tag = 'scoped memory for tpu_custom_call.1']
    #allocation7 [shape = 'u8[32768]{0}', space=vmem, size = 0x8000, scoped, tag = 'output window, operand 0, single buffered']
    %10 = vsyncpa [#allocation3], 0
    %11 = vsyncpa [#allocation6], 0
    %12 = vsyncpa [#allocation4], 0
    // Predicated region
    $region2: #{tpu_custom_call.1} parent=1 // pred_check
      _
    $region3: #{tpu_custom_call.1} parent=1 // pred_check_branch
      %14 = sbr.rel (0) target = $region5
    $region4: #{tpu_custom_call.1} parent=1 // pred_region
      _
    $region5: #{tpu_custom_call.1} parent=1 // pred_fallthru
      _
    // Predicated region
    $region6: #{tpu_custom_call.1} parent=1 // pred_check
      _
    $region7: #{tpu_custom_call.1} parent=1 // pred_check_branch
      %16 = sbr.rel (0) target = $region9
    $region8: #{tpu_custom_call.1} parent=1 // pred_region
      _
    $region9: #{tpu_custom_call.1} parent=1 // pred_fallthru
      _
    // Predicated region
    $region10: #{tpu_custom_call.1} parent=1 // pred_check
      _
    $region11: #{tpu_custom_call.1} parent=1 // pred_check_branch
      %18 = sbr.rel (0) target = $region13
    $region12: #{tpu_custom_call.1} parent=1 // pred_region
      %s20 = ssub.s32 2048, 2048
      %21 = vsyncadd [#allocation3], %s20
      %s22 = sshll.u32 [#allocation2], 4
      %s23 = int_to_ptr.vmem [resolvable:$true] %s22
      %28 = dma.hbm_to_vmem [thread:$0]  %s2, 2048, %s23, [#allocation3], 128, 128, 8
    $region13: #{tpu_custom_call.1} parent=1 // pred_fallthru
      _
    // Predicated region
    $region14: #{tpu_custom_call.1} parent=1 // pred_check
      _
    $region15: #{tpu_custom_call.1} parent=1 // pred_check_branch
      %30 = sbr.rel (0) target = $region17
    $region16: #{tpu_custom_call.1} parent=1 // pred_region
      %s32 = ssub.s32 2048, 2048
      %33 = vsyncadd [#allocation6], %s32
      %s34 = sshll.u32 [#allocation5], 4
      %s35 = int_to_ptr.vmem [resolvable:$true] %s34
      %40 = dma.hbm_to_vmem [thread:$0]  %s3, 2048, %s35, [#allocation6], 128, 128, 8
    $region17: #{tpu_custom_call.1} parent=1 // pred_fallthru
      _
    // Predicated region
    $region18: #{tpu_custom_call.1} parent=1 // pred_check
      _
    $region19: #{tpu_custom_call.1} parent=1 // pred_check_branch
      %42 = sbr.rel (0) target = $region21
    $region20: #{tpu_custom_call.1} parent=1 // pred_region
      _
    $region21: #{tpu_custom_call.1} parent=1 // pred_fallthru
      _
    // Predicated region
    $region22: #{tpu_custom_call.1} parent=1 // pred_check
      _
    $region23: #{tpu_custom_call.1} parent=1 // pred_check_branch
      %44 = sbr.rel (0) target = $region25
    $region24: #{tpu_custom_call.1} parent=1 // pred_region
      %45 = dma.done [#allocation3], 2048
    $region25: #{tpu_custom_call.1} parent=1 // pred_fallthru
      _
    // Predicated region
    $region26: #{tpu_custom_call.1} parent=1 // pred_check
      _
    $region27: #{tpu_custom_call.1} parent=1 // pred_check_branch
      %47 = sbr.rel (0) target = $region29
    $region28: #{tpu_custom_call.1} parent=1 // pred_region
      %48 = dma.done [#allocation6], 2048
    $region29: #{tpu_custom_call.1} parent=1 // pred_fallthru
      _
    %v49 = vld [vmem:[%s0] sm:$0xff]
    %v50 = vld [vmem:[%s0 + $0x8] sm:$0xff]
    %v51 = vld [vmem:[%s0 + $0x10] sm:$0xff]
    %v52 = vld [vmem:[%s0 + $0x18] sm:$0xff]
    %v53 = vld [vmem:[%s0 + $0x20] sm:$0xff]
    %v54 = vld [vmem:[%s0 + $0x28] sm:$0xff]
    %v55 = vld [vmem:[%s0 + $0x30] sm:$0xff]
    %v56 = vld [vmem:[%s0 + $0x38] sm:$0xff]
    %v57 = vld [vmem:[%s4] sm:$0x3]
    %v58 = vld [vmem:[%s1] sm:$0xff]
    %vm59 = vcmask 64512
    %v61 = vsel %vm59, %v49, 0
    %v64 = vsel %vm59, %v50, 0
    %v67 = vsel %vm59, %v51, 0
    %v70 = vsel %vm59, %v52, 0
    %v73 = vsel %vm59, %v53, 0
    %v76 = vsel %vm59, %v54, 0
    %v79 = vsel %vm59, %v55, 0
    %v82 = vsel %vm59, %v56, 0
    %84 = vmatprep.subr.mxu0 0.0
    %85 = vmatpush1.msra.mxu0 0.0
    %86 = vmatprep.subr.mxu0 0.0
    %87 = vmatpush1.msra.mxu0 0.0
    %88 = vmatprep.subr.mxu0 0.0
    %89 = vmatpush1.msra.mxu0 0.0
    %90 = vmatprep.subr.mxu0 0.0
    %91 = vmatpush1.msra.mxu0 0.0
    %92 = vmatprep.subr.mxu0 0.0
    %93 = vmatpush1.msra.mxu0 0.0
    %94 = vmatprep.subr.mxu0 0.0
    %95 = vmatpush1.msra.mxu0 0.0
    %96 = vmatprep.subr.mxu0 0.0
    %97 = vmatpush1.msra.mxu0 0.0
    %98 = vmatprep.subr.mxu0 0.0
    %99 = vmatpush1.msra.mxu0 0.0
    %100 = vmatprep.subr.mxu0 0.0
    %101 = vmatpush1.msra.mxu0 0.0
    %102 = vmatprep.subr.mxu0 0.0
    %103 = vmatpush1.msra.mxu0 0.0
    %104 = vmatprep.subr.mxu0 0.0
    %105 = vmatpush1.msra.mxu0 0.0
    %106 = vmatprep.subr.mxu0 0.0
    %107 = vmatpush1.msra.mxu0 0.0
    %108 = vmatprep.subr.mxu0 0.0
    %109 = vmatpush1.msra.mxu0 0.0
    %110 = vmatprep.subr.mxu0 0.0
    %111 = vmatpush1.msra.mxu0 0.0
    %112 = vmatprep.subr.mxu0 0.0
    %113 = vmatpush1.msra.mxu0 0.0
    %114 = vmatprep.subr.mxu0 0.0
    %115 = vmatpush1.msra.mxu0 %v58
    %116 = vmatprep.subr.mxu0 0.0
    %117 = vmatpush2.msra.mxu0 0.0
    %118 = vmatprep.subr.mxu0 0.0
    %119 = vmatpush2.msra.mxu0 0.0
    %120 = vmatprep.subr.mxu0 0.0
    %121 = vmatpush2.msra.mxu0 0.0
    %122 = vmatprep.subr.mxu0 0.0
    %123 = vmatpush2.msra.mxu0 0.0
    %124 = vmatprep.subr.mxu0 0.0
    %125 = vmatpush2.msra.mxu0 0.0
    %126 = vmatprep.subr.mxu0 0.0
    %127 = vmatpush2.msra.mxu0 0.0
    %128 = vmatprep.subr.mxu0 0.0
    %129 = vmatpush2.msra.mxu0 0.0
    %130 = vmatprep.subr.mxu0 0.0
    %131 = vmatpush2.msra.mxu0 0.0
    %132 = vmatprep.subr.mxu0 0.0
    %133 = vmatpush2.msra.mxu0 0.0
    %134 = vmatprep.subr.mxu0 0.0
    %135 = vmatpush2.msra.mxu0 0.0
    %136 = vmatprep.subr.mxu0 0.0
    %137 = vmatpush2.msra.mxu0 0.0
    %138 = vmatprep.subr.mxu0 0.0
    %139 = vmatpush2.msra.mxu0 0.0
    %140 = vmatprep.subr.mxu0 0.0
    %141 = vmatpush2.msra.mxu0 0.0
    %142 = vmatprep.subr.mxu0 0.0
    %143 = vmatpush2.msra.mxu0 0.0
    %144 = vmatprep.subr.mxu0 0.0
    %145 = vmatpush2.msra.mxu0 0.0
    %146 = vmatprep.subr.mxu0 0.0
    %147 = vmatpush2.msra.mxu0 0.0
    %148 = vmatprep.mubr.f32.mxu0 0.0
    %149 = vmatmul.mubr.f32.gmra.mxu0 %v61
    %v150 = vpop.f32.mrf.mxu0
    %v151 = vadd.f32 0.0, %v150
    %v152 = vpop.f32.mrf.mxu0
    %153 = vmatprep.mubr.f32.mxu0 0.0
    %154 = vmatmul.mubr.f32.gmra.mxu0 %v64
    %v155 = vpop.f32.mrf.mxu0
    %v156 = vadd.f32 0.0, %v155
    %v157 = vpop.f32.mrf.mxu0
    %158 = vmatprep.mubr.f32.mxu0 0.0
    %159 = vmatmul.mubr.f32.gmra.mxu0 %v67
    %v160 = vpop.f32.mrf.mxu0
    %v161 = vadd.f32 0.0, %v160
    %v162 = vpop.f32.mrf.mxu0
    %163 = vmatprep.mubr.f32.mxu0 0.0
    %164 = vmatmul.mubr.f32.gmra.mxu0 %v70
    %v165 = vpop.f32.mrf.mxu0
    %v166 = vadd.f32 0.0, %v165
    %v167 = vpop.f32.mrf.mxu0
    %168 = vmatprep.mubr.f32.mxu0 0.0
    %169 = vmatmul.mubr.f32.gmra.mxu0 %v73
    %v170 = vpop.f32.mrf.mxu0
    %v171 = vadd.f32 0.0, %v170
    %v172 = vpop.f32.mrf.mxu0
    %173 = vmatprep.mubr.f32.mxu0 0.0
    %174 = vmatmul.mubr.f32.gmra.mxu0 %v76
    %v175 = vpop.f32.mrf.mxu0
    %v176 = vadd.f32 0.0, %v175
    %v177 = vpop.f32.mrf.mxu0
    %178 = vmatprep.mubr.f32.mxu0 0.0
    %179 = vmatmul.mubr.f32.gmra.mxu0 %v79
    %v180 = vpop.f32.mrf.mxu0
    %v181 = vadd.f32 0.0, %v180
    %v182 = vpop.f32.mrf.mxu0
    %183 = vmatprep.mubr.f32.mxu0 0.0
    %184 = vmatmul.mubr.f32.gmra.mxu0 %v82
    %v185 = vpop.f32.mrf.mxu0
    %v186 = vadd.f32 0.0, %v185
    %v187 = vpop.f32.mrf.mxu0
    %188 = vdwg.mxu0
    %v189 = vmax.f32 %v151, 0.0
    %v190 = vmax.f32 %v156, 0.0
    %v191 = vmax.f32 %v161, 0.0
    %v192 = vmax.f32 %v166, 0.0
    %v193 = vmax.f32 %v171, 0.0
    %v194 = vmax.f32 %v176, 0.0
    %v195 = vmax.f32 %v181, 0.0
    %v196 = vmax.f32 %v186, 0.0
    %v197 = vld [vmem:[#allocation2] sm:$0xff]
    %v198 = vld [vmem:[#allocation2 + $0x8] sm:$0xff]
    %v199 = vld [vmem:[#allocation2 + $0x10] sm:$0xff]
    %v200 = vld [vmem:[#allocation2 + $0x18] sm:$0xff]
    %v201 = vld [vmem:[#allocation2 + $0x20] sm:$0xff]
    %v202 = vld [vmem:[#allocation2 + $0x28] sm:$0xff]
    %v203 = vld [vmem:[#allocation2 + $0x30] sm:$0xff]
    %v204 = vld [vmem:[#allocation2 + $0x38] sm:$0xff]
    %v205 = vld [vmem:[#allocation2 + $0x40] sm:$0xff]
    %v206 = vld [vmem:[#allocation2 + $0x48] sm:$0xff]
    %v207 = vld [vmem:[#allocation2 + $0x50] sm:$0xff]
    %v208 = vld [vmem:[#allocation2 + $0x58] sm:$0xff]
    %v209 = vld [vmem:[#allocation2 + $0x60] sm:$0xff]
    %v210 = vld [vmem:[#allocation2 + $0x68] sm:$0xff]
    %v211 = vld [vmem:[#allocation2 + $0x70] sm:$0xff]
    %v212 = vld [vmem:[#allocation2 + $0x78] sm:$0xff]
    %v213 = vlaneseq
    %v214 = vshrl.u32 %v213, 7
    %v215 = vsub.s32 0, %v214
    %v216 = vrot.slane %v57, %v215
    %217 = vmatprep.subr.mxu0 0.0
    %218 = vmatpush1.msra.mxu0 %v212
    %219 = vmatprep.subr.mxu0 0.0
    %220 = vmatpush1.msra.mxu0 %v211
    %221 = vmatprep.subr.mxu0 0.0
    %222 = vmatpush1.msra.mxu0 %v210
    %223 = vmatprep.subr.mxu0 0.0
    %224 = vmatpush1.msra.mxu0 %v209
    %225 = vmatprep.subr.mxu0 0.0
    %226 = vmatpush1.msra.mxu0 %v208
    %227 = vmatprep.subr.mxu0 0.0
    %228 = vmatpush1.msra.mxu0 %v207
    %229 = vmatprep.subr.mxu0 0.0
    %230 = vmatpush1.msra.mxu0 %v206
    %231 = vmatprep.subr.mxu0 0.0
    %232 = vmatpush1.msra.mxu0 %v205
    %233 = vmatprep.subr.mxu0 0.0
    %234 = vmatpush1.msra.mxu0 %v204
    %235 = vmatprep.subr.mxu0 0.0
    %236 = vmatpush1.msra.mxu0 %v203
    %237 = vmatprep.subr.mxu0 0.0
    %238 = vmatpush1.msra.mxu0 %v202
    %239 = vmatprep.subr.mxu0 0.0
    %240 = vmatpush1.msra.mxu0 %v201
    %241 = vmatprep.subr.mxu0 0.0
    %242 = vmatpush1.msra.mxu0 %v200
    %243 = vmatprep.subr.mxu0 0.0
    %244 = vmatpush1.msra.mxu0 %v199
    %245 = vmatprep.subr.mxu0 0.0
    %246 = vmatpush1.msra.mxu0 %v198
    %247 = vmatprep.subr.mxu0 0.0
    %248 = vmatpush1.msra.mxu0 %v197
    %249 = vmatprep.subr.mxu0 0.0
    %250 = vmatpush2.msra.mxu0 0.0
    %251 = vmatprep.subr.mxu0 0.0
    %252 = vmatpush2.msra.mxu0 0.0
    %253 = vmatprep.subr.mxu0 0.0
    %254 = vmatpush2.msra.mxu0 0.0
    %255 = vmatprep.subr.mxu0 0.0
    %256 = vmatpush2.msra.mxu0 0.0
    %257 = vmatprep.subr.mxu0 0.0
    %258 = vmatpush2.msra.mxu0 0.0
    %259 = vmatprep.subr.mxu0 0.0
    %260 = vmatpush2.msra.mxu0 0.0
    %261 = vmatprep.subr.mxu0 0.0
    %262 = vmatpush2.msra.mxu0 0.0
    %263 = vmatprep.subr.mxu0 0.0
    %264 = vmatpush2.msra.mxu0 0.0
    %265 = vmatprep.subr.mxu0 0.0
    %266 = vmatpush2.msra.mxu0 0.0
    %267 = vmatprep.subr.mxu0 0.0
    %268 = vmatpush2.msra.mxu0 0.0
    %269 = vmatprep.subr.mxu0 0.0
    %270 = vmatpush2.msra.mxu0 0.0
    %271 = vmatprep.subr.mxu0 0.0
    %272 = vmatpush2.msra.mxu0 0.0
    %273 = vmatprep.subr.mxu0 0.0
    %274 = vmatpush2.msra.mxu0 0.0
    %275 = vmatprep.subr.mxu0 0.0
    %276 = vmatpush2.msra.mxu0 0.0
    %277 = vmatprep.subr.mxu0 0.0
    %278 = vmatpush2.msra.mxu0 0.0
    %279 = vmatprep.subr.mxu0 0.0
    %280 = vmatpush2.msra.mxu0 0.0
    %281 = vmatprep.mubr.f32.mxu0 0.0
    %282 = vmatmul.mubr.f32.gmra.mxu0 %v189
    %v283 = vpop.f32.mrf.mxu0
    %v284 = vadd.f32 %v216, %v283
    %v285 = vpop.f32.mrf.mxu0
    %286 = vmatprep.mubr.f32.mxu0 0.0
    %287 = vmatmul.mubr.f32.gmra.mxu0 %v190
    %v288 = vpop.f32.mrf.mxu0
    %v289 = vadd.f32 %v216, %v288
    %v290 = vpop.f32.mrf.mxu0
    %291 = vmatprep.mubr.f32.mxu0 0.0
    %292 = vmatmul.mubr.f32.gmra.mxu0 %v191
    %v293 = vpop.f32.mrf.mxu0
    %v294 = vadd.f32 %v216, %v293
    %v295 = vpop.f32.mrf.mxu0
    %296 = vmatprep.mubr.f32.mxu0 0.0
    %297 = vmatmul.mubr.f32.gmra.mxu0 %v192
    %v298 = vpop.f32.mrf.mxu0
    %v299 = vadd.f32 %v216, %v298
    %v300 = vpop.f32.mrf.mxu0
    %301 = vmatprep.mubr.f32.mxu0 0.0
    %302 = vmatmul.mubr.f32.gmra.mxu0 %v193
    %v303 = vpop.f32.mrf.mxu0
    %v304 = vadd.f32 %v216, %v303
    %v305 = vpop.f32.mrf.mxu0
    %306 = vmatprep.mubr.f32.mxu0 0.0
    %307 = vmatmul.mubr.f32.gmra.mxu0 %v194
    %v308 = vpop.f32.mrf.mxu0
    %v309 = vadd.f32 %v216, %v308
    %v310 = vpop.f32.mrf.mxu0
    %311 = vmatprep.mubr.f32.mxu0 0.0
    %312 = vmatmul.mubr.f32.gmra.mxu0 %v195
    %v313 = vpop.f32.mrf.mxu0
    %v314 = vadd.f32 %v216, %v313
    %v315 = vpop.f32.mrf.mxu0
    %316 = vmatprep.mubr.f32.mxu0 0.0
    %317 = vmatmul.mubr.f32.gmra.mxu0 %v196
    %v318 = vpop.f32.mrf.mxu0
    %v319 = vadd.f32 %v216, %v318
    %v320 = vpop.f32.mrf.mxu0
    %321 = vdwg.mxu0
    %v322 = vmax.f32 %v284, 0.0
    %v323 = vmax.f32 %v289, 0.0
    %v324 = vmax.f32 %v294, 0.0
    %v325 = vmax.f32 %v299, 0.0
    %v326 = vmax.f32 %v304, 0.0
    %v327 = vmax.f32 %v309, 0.0
    %v328 = vmax.f32 %v314, 0.0
    %v329 = vmax.f32 %v319, 0.0
    %v330 = vld [vmem:[#allocation5] sm:$0xff]
    %v331 = vld [vmem:[#allocation5 + $0x8] sm:$0xff]
    %v332 = vld [vmem:[#allocation5 + $0x10] sm:$0xff]
    %v333 = vld [vmem:[#allocation5 + $0x18] sm:$0xff]
    %v334 = vld [vmem:[#allocation5 + $0x20] sm:$0xff]
    %v335 = vld [vmem:[#allocation5 + $0x28] sm:$0xff]
    %v336 = vld [vmem:[#allocation5 + $0x30] sm:$0xff]
    %v337 = vld [vmem:[#allocation5 + $0x38] sm:$0xff]
    %v338 = vld [vmem:[#allocation5 + $0x40] sm:$0xff]
    %v339 = vld [vmem:[#allocation5 + $0x48] sm:$0xff]
    %v340 = vld [vmem:[#allocation5 + $0x50] sm:$0xff]
    %v341 = vld [vmem:[#allocation5 + $0x58] sm:$0xff]
    %v342 = vld [vmem:[#allocation5 + $0x60] sm:$0xff]
    %v343 = vld [vmem:[#allocation5 + $0x68] sm:$0xff]
    %v344 = vld [vmem:[#allocation5 + $0x70] sm:$0xff]
    %v345 = vld [vmem:[#allocation5 + $0x78] sm:$0xff]
    %v346 = vlaneseq
    %v347 = vshrl.u32 %v346, 7
    %v348 = vsub.s32 1, %v347
    %v349 = vrot.slane %v57, %v348
    %350 = vmatprep.subr.mxu0 0.0
    %351 = vmatpush1.msra.mxu0 %v345
    %352 = vmatprep.subr.mxu0 0.0
    %353 = vmatpush1.msra.mxu0 %v344
    %354 = vmatprep.subr.mxu0 0.0
    %355 = vmatpush1.msra.mxu0 %v343
    %356 = vmatprep.subr.mxu0 0.0
    %357 = vmatpush1.msra.mxu0 %v342
    %358 = vmatprep.subr.mxu0 0.0
    %359 = vmatpush1.msra.mxu0 %v341
    %360 = vmatprep.subr.mxu0 0.0
    %361 = vmatpush1.msra.mxu0 %v340
    %362 = vmatprep.subr.mxu0 0.0
    %363 = vmatpush1.msra.mxu0 %v339
    %364 = vmatprep.subr.mxu0 0.0
    %365 = vmatpush1.msra.mxu0 %v338
    %366 = vmatprep.subr.mxu0 0.0
    %367 = vmatpush1.msra.mxu0 %v337
    %368 = vmatprep.subr.mxu0 0.0
    %369 = vmatpush1.msra.mxu0 %v336
    %370 = vmatprep.subr.mxu0 0.0
    %371 = vmatpush1.msra.mxu0 %v335
    %372 = vmatprep.subr.mxu0 0.0
    %373 = vmatpush1.msra.mxu0 %v334
    %374 = vmatprep.subr.mxu0 0.0
    %375 = vmatpush1.msra.mxu0 %v333
    %376 = vmatprep.subr.mxu0 0.0
    %377 = vmatpush1.msra.mxu0 %v332
    %378 = vmatprep.subr.mxu0 0.0
    %379 = vmatpush1.msra.mxu0 %v331
    %380 = vmatprep.subr.mxu0 0.0
    %381 = vmatpush1.msra.mxu0 %v330
    %382 = vmatprep.subr.mxu0 0.0
    %383 = vmatpush2.msra.mxu0 0.0
    %384 = vmatprep.subr.mxu0 0.0
    %385 = vmatpush2.msra.mxu0 0.0
    %386 = vmatprep.subr.mxu0 0.0
    %387 = vmatpush2.msra.mxu0 0.0
    %388 = vmatprep.subr.mxu0 0.0
    %389 = vmatpush2.msra.mxu0 0.0
    %390 = vmatprep.subr.mxu0 0.0
    %391 = vmatpush2.msra.mxu0 0.0
    %392 = vmatprep.subr.mxu0 0.0
    %393 = vmatpush2.msra.mxu0 0.0
    %394 = vmatprep.subr.mxu0 0.0
    %395 = vmatpush2.msra.mxu0 0.0
    %396 = vmatprep.subr.mxu0 0.0
    %397 = vmatpush2.msra.mxu0 0.0
    %398 = vmatprep.subr.mxu0 0.0
    %399 = vmatpush2.msra.mxu0 0.0
    %400 = vmatprep.subr.mxu0 0.0
    %401 = vmatpush2.msra.mxu0 0.0
    %402 = vmatprep.subr.mxu0 0.0
    %403 = vmatpush2.msra.mxu0 0.0
    %404 = vmatprep.subr.mxu0 0.0
    %405 = vmatpush2.msra.mxu0 0.0
    %406 = vmatprep.subr.mxu0 0.0
    %407 = vmatpush2.msra.mxu0 0.0
    %408 = vmatprep.subr.mxu0 0.0
    %409 = vmatpush2.msra.mxu0 0.0
    %410 = vmatprep.subr.mxu0 0.0
    %411 = vmatpush2.msra.mxu0 0.0
    %412 = vmatprep.subr.mxu0 0.0
    %413 = vmatpush2.msra.mxu0 0.0
    %414 = vmatprep.mubr.f32.mxu0 0.0
    %415 = vmatmul.mubr.f32.gmra.mxu0 %v322
    %v416 = vpop.f32.mrf.mxu0
    %v417 = vadd.f32 %v349, %v416
    %v418 = vpop.f32.mrf.mxu0
    %419 = vmatprep.mubr.f32.mxu0 0.0
    %420 = vmatmul.mubr.f32.gmra.mxu0 %v323
    %v421 = vpop.f32.mrf.mxu0
    %v422 = vadd.f32 %v349, %v421
    %v423 = vpop.f32.mrf.mxu0
    %424 = vmatprep.mubr.f32.mxu0 0.0
    %425 = vmatmul.mubr.f32.gmra.mxu0 %v324
    %v426 = vpop.f32.mrf.mxu0
    %v427 = vadd.f32 %v349, %v426
    %v428 = vpop.f32.mrf.mxu0
    %429 = vmatprep.mubr.f32.mxu0 0.0
    %430 = vmatmul.mubr.f32.gmra.mxu0 %v325
    %v431 = vpop.f32.mrf.mxu0
    %v432 = vadd.f32 %v349, %v431
    %v433 = vpop.f32.mrf.mxu0
    %434 = vmatprep.mubr.f32.mxu0 0.0
    %435 = vmatmul.mubr.f32.gmra.mxu0 %v326
    %v436 = vpop.f32.mrf.mxu0
    %v437 = vadd.f32 %v349, %v436
    %v438 = vpop.f32.mrf.mxu0
    %439 = vmatprep.mubr.f32.mxu0 0.0
    %440 = vmatmul.mubr.f32.gmra.mxu0 %v327
    %v441 = vpop.f32.mrf.mxu0
    %v442 = vadd.f32 %v349, %v441
    %v443 = vpop.f32.mrf.mxu0
    %444 = vmatprep.mubr.f32.mxu0 0.0
    %445 = vmatmul.mubr.f32.gmra.mxu0 %v328
    %v446 = vpop.f32.mrf.mxu0
    %v447 = vadd.f32 %v349, %v446
    %v448 = vpop.f32.mrf.mxu0
    %449 = vmatprep.mubr.f32.mxu0 0.0
    %450 = vmatmul.mubr.f32.gmra.mxu0 %v329
    %v451 = vpop.f32.mrf.mxu0
    %v452 = vadd.f32 %v349, %v451
    %v453 = vpop.f32.mrf.mxu0
    %454 = vdwg.mxu0
    %455 = vst [vmem:[#allocation7] sm:$0xff] %v417
    %456 = vst [vmem:[#allocation7 + $0x8] sm:$0xff] %v422
    %457 = vst [vmem:[#allocation7 + $0x10] sm:$0xff] %v427
    %458 = vst [vmem:[#allocation7 + $0x18] sm:$0xff] %v432
    %459 = vst [vmem:[#allocation7 + $0x20] sm:$0xff] %v437
    %460 = vst [vmem:[#allocation7 + $0x28] sm:$0xff] %v442
    %461 = vst [vmem:[#allocation7 + $0x30] sm:$0xff] %v447
    %462 = vst [vmem:[#allocation7 + $0x38] sm:$0xff] %v452
    // Predicated region
    $region30: #{tpu_custom_call.1} parent=1 // pred_check
      _
    $region31: #{tpu_custom_call.1} parent=1 // pred_check_branch
      %464 = sbr.rel (0) target = $region33
    $region32: #{tpu_custom_call.1} parent=1 // pred_region
      %s466 = ssub.s32 1024, 1024
      %467 = vsyncadd [#allocation4], %s466
      %s468 = sshll.u32 [#allocation7], 4
      %s469 = int_to_ptr.vmem [resolvable:$true] %s468
      %474 = dma.vmem_to_hbm [thread:$0]  %s469, 1024, %s5, [#allocation4], 128, 128, 8
    $region33: #{tpu_custom_call.1} parent=1 // pred_fallthru
      _
    // Predicated region
    $region34: #{tpu_custom_call.1} parent=1 // pred_check
      _
    $region35: #{tpu_custom_call.1} parent=1 // pred_check_branch
      %476 = sbr.rel (0) target = $region37
    $region36: #{tpu_custom_call.1} parent=1 // pred_region
      %477 = dma.done [#allocation4], 1024
    $region37: #{tpu_custom_call.1} parent=1 // pred_fallthru
      _
    %478 = vsyncpa [#allocation3], 1
    %479 = vsyncpa [#allocation6], 1
    %480 = vsyncpa [#allocation4], 1

</llo_original>
